<compile_context>
chip_gen: v7x
topology: tpu7x:2x2x1
jax: 0.10.0
libtpu: 0.0.40
codegen_flags: <defaults>
</compile_context>

<pallas_src>
import jax
import jax.numpy as jnp
from jax.experimental import pallas as pl
from jax.experimental.pallas import tpu as pltpu

LANE = 128   # vreg lane width
SUBLANE = 8  # f32 sublane count


def _round_up(n, m):
    return ((n + m - 1) // m) * m


def _elu(x):
    # PyTorch F.elu default alpha = 1.0.  (Clamp is cheap VPU work and keeps
    # the discarded where-branch finite.)
    return jnp.where(x > 0, x, jnp.exp(jnp.minimum(x, 0.0)) - 1.0)


def _stable_sigmoid(x):
    # sigmoid(x) = 0.5 * (1 + tanh(x/2)): single EUP op, never overflows,
    # unlike exp(-x) + approximate reciprocal for large |x|.
    return 0.5 * (jnp.tanh(0.5 * x) + 1.0)


def discriminator_kernel(x_ref, w1_ref, b1_ref, w2_ref, b2_ref, w3_ref, b3_ref,
                         o_ref):
    xt = x_ref[...]                                                  # bf16 [I, TB]

    # Layer 1: Linear (bf16 MXU, f32 acc) + bias + ELU
    h1 = jnp.dot(w1_ref[...], xt, preferred_element_type=jnp.float32)
    h1 = _elu(h1 + b1_ref[...])                                      # f32 [H, TB]

    # Layer 2: Linear + ELU
    h2 = jnp.dot(w2_ref[...], h1.astype(jnp.bfloat16),
                 preferred_element_type=jnp.float32)
    h2 = _elu(h2 + b2_ref[...])                                      # f32 [H, TB]

    # Layer 3: Linear + sigmoid (tanh-based, overflow-free)
    h3 = jnp.dot(w3_ref[...], h2.astype(jnp.bfloat16),
                 preferred_element_type=jnp.float32)
    h3 = h3 + b3_ref[...]                                            # f32 [Op, TB]
    o_ref[...] = _stable_sigmoid(h3).astype(o_ref.dtype)


def discriminator_forward(x, params, *, batch_tile=2048):
    """x: [B, input_size] float32. params: dict of w1,b1,w2,b2,w3,b3 (f32)."""
    w1, b1 = params["w1"], params["b1"]   # [I, H], [1, H]
    w2, b2 = params["w2"], params["b2"]   # [H, H], [1, H]
    w3, b3 = params["w3"], params["b3"]   # [H, O], [1, O]

    B, I = x.shape
    H = w1.shape[1]
    O = w3.shape[1]
    O_p = _round_up(O, SUBLANE)   # output rows padded to one sublane group only

    # Batch lives on the lane axis -> tile must be a multiple of 128.  Keep
    # >=4 grid steps when the batch allows it (v7x: 2 cores x >=2 pipelined
    # steps), otherwise take the whole (lane-rounded) batch in one step.
    B128 = _round_up(B, LANE)
    TB = min(batch_tile, B128, _round_up(pl.cdiv(B128, 4), LANE))
    TB = max(TB, LANE)
    B_p = _round_up(B128, TB)

    # Transposed, batch-on-lanes operands.  Only the batch is padded; feature
    # dims keep their real sizes, so no padding traffic hits HBM.
    x_t = jnp.pad(x, ((0, B_p - B), (0, 0))).T.astype(jnp.bfloat16)      # [I, B_p]
    w1_t = w1.T.astype(jnp.bfloat16)                                     # [H, I]
    w2_t = w2.T.astype(jnp.bfloat16)                                     # [H, H]
    w3_t = jnp.pad(w3, ((0, 0), (0, O_p - O))).T.astype(jnp.bfloat16)    # [O_p, H]
    b1_t = b1.reshape(H, 1).astype(jnp.float32)                          # [H, 1]
    b2_t = b2.reshape(H, 1).astype(jnp.float32)                          # [H, 1]
    b3_t = jnp.pad(b3.reshape(O, 1), ((0, O_p - O), (0, 0))).astype(jnp.float32)

    grid = (B_p // TB,)

    flops = 2 * B_p * (I * H + H * H + H * O_p)
    transcendentals = B_p * (2 * H + O_p)          # 2x ELU exp + 1 tanh
    bytes_accessed = (x_t.size * 2
                      + (w1_t.size + w2_t.size + w3_t.size) * 2
                      + (b1_t.size + b2_t.size + b3_t.size) * 4
                      + O_p * B_p * 4)

    out = pl.pallas_call(
        discriminator_kernel,
        out_shape=jax.ShapeDtypeStruct((O_p, B_p), jnp.float32),
        grid=grid,
        in_specs=[
            pl.BlockSpec((I, TB), lambda i: (0, i)),    # x tile (pipelined)
            pl.BlockSpec((H, I), lambda i: (0, 0)),     # w1^T (VMEM-resident)
            pl.BlockSpec((H, 1), lambda i: (0, 0)),     # b1
            pl.BlockSpec((H, H), lambda i: (0, 0)),     # w2^T
            pl.BlockSpec((H, 1), lambda i: (0, 0)),     # b2
            pl.BlockSpec((O_p, H), lambda i: (0, 0)),   # w3^T
            pl.BlockSpec((O_p, 1), lambda i: (0, 0)),   # b3
        ],
        out_specs=pl.BlockSpec((O_p, TB), lambda i: (0, i)),
        compiler_params=pltpu.CompilerParams(
            dimension_semantics=("parallel",)),
        cost_estimate=pl.CostEstimate(
            flops=flops,
            transcendentals=transcendentals,
            bytes_accessed=bytes_accessed),
    )(x_t, w1_t, b1_t, w2_t, b2_t, w3_t, b3_t)

    # Slice the real output rows/columns and return in PyTorch's [B, O] layout.
    return out[:O, :B].T


def init_params(key, input_size, hidden_size, output_size):
    """Deterministic init mimicking nn.Linear's uniform(-1/sqrt(fan_in), ...)."""
    ks = jax.random.split(key, 6)

    def lin(kw, kb, fan_in, fan_out):
        bound = 1.0 / jnp.sqrt(fan_in)
        w = jax.random.uniform(kw, (fan_in, fan_out), jnp.float32, -bound, bound)
        b = jax.random.uniform(kb, (1, fan_out), jnp.float32, -bound, bound)
        return w, b

    w1, b1 = lin(ks[0], ks[1], input_size, hidden_size)
    w2, b2 = lin(ks[2], ks[3], hidden_size, hidden_size)
    w3, b3 = lin(ks[4], ks[5], hidden_size, output_size)
    return {"w1": w1, "b1": b1, "w2": w2, "b2": b2, "w3": w3, "b3": b3}


def _reference(x, p):
    # Full-precision f32 reference (PyTorch semantics).
    h1 = jax.nn.elu(x @ p["w1"] + p["b1"])
    h2 = jax.nn.elu(h1 @ p["w2"] + p["b2"])
    return jax.nn.sigmoid(h2 @ p["w3"] + p["b3"])


if __name__ == "__main__":
    B, INPUT, HIDDEN, OUTPUT = 8, 16, 32, 1

    key = jax.random.PRNGKey(0)
    k_x, k_p = jax.random.split(key)
    x = jax.random.normal(k_x, (B, INPUT), dtype=jnp.float32)
    params = init_params(k_p, INPUT, HIDDEN, OUTPUT)

    out = discriminator_forward(x, params)
    out = jax.block_until_ready(out)

    ref = _reference(x, params)
    assert out.shape == (B, OUTPUT)
    # bf16 MXU operands -> compare with a tolerance covering the expected
    # quantization error (<~1e-2 at the sigmoid output).
    assert jnp.allclose(out, ref, atol=1e-2, rtol=1e-2), "mismatch vs reference"

    print("KERNEL_OK")
</pallas_src>

<mosaic_0001>
module attributes {stable_mosaic.version = 11 : i64} {
  func.func @discriminator_kernel(%arg0: i32, %arg1: memref<16x128xbf16, #tpu.memory_space<vmem>>, %arg2: memref<32x16xbf16, #tpu.memory_space<vmem>>, %arg3: memref<32x1xf32, #tpu.memory_space<vmem>>, %arg4: memref<32x32xbf16, #tpu.memory_space<vmem>>, %arg5: memref<32x1xf32, #tpu.memory_space<vmem>>, %arg6: memref<8x32xbf16, #tpu.memory_space<vmem>>, %arg7: memref<8x1xf32, #tpu.memory_space<vmem>>, %arg8: memref<8x128xf32, #tpu.memory_space<vmem>>) attributes {dimension_semantics = [#tpu.dimension_semantics<parallel>], iteration_bounds = array<i64: 1>, scalar_prefetch = 0 : i64, scratch_operands = 0 : i64, tpu.core_type = #tpu.core_type<tc>, window_params = [{transform_indices = @transform_0, window_bounds = array<i64: 16, 128>}, {pipeline_mode = #tpu.pipeline_mode<synchronous>, transform_indices = @transform_1, window_bounds = array<i64: 32, 16>}, {pipeline_mode = #tpu.pipeline_mode<synchronous>, transform_indices = @transform_2, window_bounds = array<i64: 32, 1>}, {pipeline_mode = #tpu.pipeline_mode<synchronous>, transform_indices = @transform_3, window_bounds = array<i64: 32, 32>}, {pipeline_mode = #tpu.pipeline_mode<synchronous>, transform_indices = @transform_4, window_bounds = array<i64: 32, 1>}, {pipeline_mode = #tpu.pipeline_mode<synchronous>, transform_indices = @transform_5, window_bounds = array<i64: 8, 32>}, {pipeline_mode = #tpu.pipeline_mode<synchronous>, transform_indices = @transform_6, window_bounds = array<i64: 8, 1>}, {transform_indices = @transform_7, window_bounds = array<i64: 8, 128>}]} {
    %c0 = arith.constant 0 : index
    %c0_0 = arith.constant 0 : index
    %0 = vector.load %arg1[%c0, %c0_0] : memref<16x128xbf16, #tpu.memory_space<vmem>>, vector<16x128xbf16>
    %c0_1 = arith.constant 0 : index
    %c0_2 = arith.constant 0 : index
    %1 = vector.load %arg2[%c0_1, %c0_2] : memref<32x16xbf16, #tpu.memory_space<vmem>>, vector<32x16xbf16>
    %cst = arith.constant dense<0.000000e+00> : vector<32x128xf32>
    %2 = tpu.matmul %1, %0, %cst {dimension_numbers = #tpu.dot_dimension_numbers<[1], [0], [0], [1], [0, 0, 1, 1], [], []>} : vector<32x16xbf16>, vector<16x128xbf16>, vector<32x128xf32> -> vector<32x128xf32>
    %c0_3 = arith.constant 0 : index
    %c0_4 = arith.constant 0 : index
    %3 = vector.load %arg3[%c0_3, %c0_4] : memref<32x1xf32, #tpu.memory_space<vmem>>, vector<32x1xf32>
    %4 = vector.broadcast %3 : vector<32x1xf32> to vector<32x128xf32>
    %5 = arith.addf %2, %4 : vector<32x128xf32>
    %cst_5 = arith.constant 0.000000e+00 : f32
    %6 = vector.broadcast %cst_5 : f32 to vector<32x128xf32>
    %7 = arith.cmpf ogt, %5, %6 : vector<32x128xf32>
    %cst_6 = arith.constant 0.000000e+00 : f32
    %8 = vector.broadcast %cst_6 : f32 to vector<32x128xf32>
    %9 = arith.minimumf %5, %8 : vector<32x128xf32>
    %10 = math.exp %9 : vector<32x128xf32>
    %cst_7 = arith.constant 1.000000e+00 : f32
    %11 = vector.broadcast %cst_7 : f32 to vector<32x128xf32>
    %12 = arith.subf %10, %11 : vector<32x128xf32>
    %13 = arith.select %7, %5, %12 : vector<32x128xi1>, vector<32x128xf32>
    %c0_8 = arith.constant 0 : index
    %c0_9 = arith.constant 0 : index
    %14 = vector.load %arg4[%c0_8, %c0_9] : memref<32x32xbf16, #tpu.memory_space<vmem>>, vector<32x32xbf16>
    %15 = arith.truncf %13 : vector<32x128xf32> to vector<32x128xbf16>
    %cst_10 = arith.constant dense<0.000000e+00> : vector<32x128xf32>
    %16 = tpu.matmul %14, %15, %cst_10 {dimension_numbers = #tpu.dot_dimension_numbers<[1], [0], [0], [1], [0, 0, 1, 1], [], []>} : vector<32x32xbf16>, vector<32x128xbf16>, vector<32x128xf32> -> vector<32x128xf32>
    %c0_11 = arith.constant 0 : index
    %c0_12 = arith.constant 0 : index
    %17 = vector.load %arg5[%c0_11, %c0_12] : memref<32x1xf32, #tpu.memory_space<vmem>>, vector<32x1xf32>
    %18 = vector.broadcast %17 : vector<32x1xf32> to vector<32x128xf32>
    %19 = arith.addf %16, %18 : vector<32x128xf32>
    %cst_13 = arith.constant 0.000000e+00 : f32
    %20 = vector.broadcast %cst_13 : f32 to vector<32x128xf32>
    %21 = arith.cmpf ogt, %19, %20 : vector<32x128xf32>
    %cst_14 = arith.constant 0.000000e+00 : f32
    %22 = vector.broadcast %cst_14 : f32 to vector<32x128xf32>
    %23 = arith.minimumf %19, %22 : vector<32x128xf32>
    %24 = math.exp %23 : vector<32x128xf32>
    %cst_15 = arith.constant 1.000000e+00 : f32
    %25 = vector.broadcast %cst_15 : f32 to vector<32x128xf32>
    %26 = arith.subf %24, %25 : vector<32x128xf32>
    %27 = arith.select %21, %19, %26 : vector<32x128xi1>, vector<32x128xf32>
    %c0_16 = arith.constant 0 : index
    %c0_17 = arith.constant 0 : index
    %28 = vector.load %arg6[%c0_16, %c0_17] : memref<8x32xbf16, #tpu.memory_space<vmem>>, vector<8x32xbf16>
    %29 = arith.truncf %27 : vector<32x128xf32> to vector<32x128xbf16>
    %cst_18 = arith.constant dense<0.000000e+00> : vector<8x128xf32>
    %30 = tpu.matmul %28, %29, %cst_18 {dimension_numbers = #tpu.dot_dimension_numbers<[1], [0], [0], [1], [0, 0, 1, 1], [], []>} : vector<8x32xbf16>, vector<32x128xbf16>, vector<8x128xf32> -> vector<8x128xf32>
    %c0_19 = arith.constant 0 : index
    %c0_20 = arith.constant 0 : index
    %31 = vector.load %arg7[%c0_19, %c0_20] : memref<8x1xf32, #tpu.memory_space<vmem>>, vector<8x1xf32>
    %32 = vector.broadcast %31 : vector<8x1xf32> to vector<8x128xf32>
    %33 = arith.addf %30, %32 : vector<8x128xf32>
    %cst_21 = arith.constant 5.000000e-01 : f32
    %34 = vector.broadcast %cst_21 : f32 to vector<8x128xf32>
    %35 = arith.mulf %34, %33 : vector<8x128xf32>
    %36 = math.tanh %35 : vector<8x128xf32>
    %cst_22 = arith.constant 1.000000e+00 : f32
    %37 = vector.broadcast %cst_22 : f32 to vector<8x128xf32>
    %38 = arith.addf %36, %37 : vector<8x128xf32>
    %cst_23 = arith.constant 5.000000e-01 : f32
    %39 = vector.broadcast %cst_23 : f32 to vector<8x128xf32>
    %40 = arith.mulf %39, %38 : vector<8x128xf32>
    %c0_24 = arith.constant 0 : index
    %c0_25 = arith.constant 0 : index
    %41 = vector.load %arg8[%c0_24, %c0_25] : memref<8x128xf32, #tpu.memory_space<vmem>>, vector<8x128xf32>
    tpu.vector_store %arg8[%c0_24, %c0_25], %40 {strides = array<i32>} : memref<8x128xf32, #tpu.memory_space<vmem>>, vector<8x128xf32>,
    return
  }
  func.func @transform_0(%arg0: i32) -> (i32, i32) {
    %c0_i32 = arith.constant 0 : i32
    %c0_i32_0 = arith.constant 0 : i32
    return %c0_i32, %arg0 : i32, i32
  }
  func.func @transform_1(%arg0: i32) -> (i32, i32) {
    %c0_i32 = arith.constant 0 : i32
    %c0_i32_0 = arith.constant 0 : i32
    %c0_i32_1 = arith.constant 0 : i32
    return %c0_i32, %c0_i32_0 : i32, i32
  }
  func.func @transform_2(%arg0: i32) -> (i32, i32) {
    %c0_i32 = arith.constant 0 : i32
    %c0_i32_0 = arith.constant 0 : i32
    %c0_i32_1 = arith.constant 0 : i32
    return %c0_i32, %c0_i32_0 : i32, i32
  }
  func.func @transform_3(%arg0: i32) -> (i32, i32) {
    %c0_i32 = arith.constant 0 : i32
    %c0_i32_0 = arith.constant 0 : i32
    %c0_i32_1 = arith.constant 0 : i32
    return %c0_i32, %c0_i32_0 : i32, i32
  }
  func.func @transform_4(%arg0: i32) -> (i32, i32) {
    %c0_i32 = arith.constant 0 : i32
    %c0_i32_0 = arith.constant 0 : i32
    %c0_i32_1 = arith.constant 0 : i32
    return %c0_i32, %c0_i32_0 : i32, i32
  }
  func.func @transform_5(%arg0: i32) -> (i32, i32) {
    %c0_i32 = arith.constant 0 : i32
    %c0_i32_0 = arith.constant 0 : i32
    %c0_i32_1 = arith.constant 0 : i32
    return %c0_i32, %c0_i32_0 : i32, i32
  }
  func.func @transform_6(%arg0: i32) -> (i32, i32) {
    %c0_i32 = arith.constant 0 : i32
    %c0_i32_0 = arith.constant 0 : i32
    %c0_i32_1 = arith.constant 0 : i32
    return %c0_i32, %c0_i32_0 : i32, i32
  }
  func.func @transform_7(%arg0: i32) -> (i32, i32) {
    %c0_i32 = arith.constant 0 : i32
    %c0_i32_0 = arith.constant 0 : i32
    return %c0_i32, %arg0 : i32, i32
  }
}

</mosaic_0001>

<llo_original>
// kernel: tpu_custom_call.1
$region0: #{tpu_custom_call.1}
  #allocation0 [shape = 'u32[]', space=smem, size = 0x4, offset = 0x4, fixed_abs, tag = 'smem constant byte address 0x4 - core index']
  #allocation1 [shape = 'u32[144,128]{1,0:T(1,128)}', space=vmem, size = 0x12000, scoped, tag = 'internal scratch']
  %s0 = inlined_call_operand.vmem [shape: bf16[16,128], index: 0, kind: input, shape index: {}]
  %s1 = inlined_call_operand.vmem [shape: bf16[32,16], index: 1, kind: input, shape index: {}]
  %s2 = inlined_call_operand.vmem [shape: f32[32,1], index: 2, kind: input, shape index: {}]
  %s3 = inlined_call_operand.vmem [shape: bf16[32,32], index: 3, kind: input, shape index: {}]
  %s4 = inlined_call_operand.vmem [shape: f32[32,1], index: 4, kind: input, shape index: {}]
  %s5 = inlined_call_operand.vmem [shape: bf16[8,32], index: 5, kind: input, shape index: {}]
  %s6 = inlined_call_operand.vmem [shape: f32[8,1], index: 6, kind: input, shape index: {}]
  %s7 = inlined_call_operand.hbm [shape: f32[8,128], index: 7, kind: output, shape index: {}]
  %s8 = sld [smem:[#allocation0]]
  $region38: #{tpu_custom_call.1} parent=0
    _
  %s10 = ssub.s32 1, %s8
  %s11 = scalar_select 0, %s10, %s8
  $region1: #{tpu_custom_call.1} parent=0
    #allocation2 [shape = 'u8[4096]{0}', space=vmem, size = 0x1000, scoped, tag = 'output window, operand 0, single buffered']
    #allocation3 [shape = 's32[1]{0}', space=sflag, size = 0x4, scoped, tag = 'scoped memory for tpu_custom_call.1']
    %12 = vsyncpa [#allocation3], 0
    // Predicated region
    $region2: #{tpu_custom_call.1} parent=1 // pred_check
      _
    $region3: #{tpu_custom_call.1} parent=1 // pred_check_branch
      %14 = sbr.rel (0) target = $region5
    $region4: #{tpu_custom_call.1} parent=1 // pred_region
      _
    $region5: #{tpu_custom_call.1} parent=1 // pred_fallthru
      _
    // Predicated region
    $region6: #{tpu_custom_call.1} parent=1 // pred_check
      _
    $region7: #{tpu_custom_call.1} parent=1 // pred_check_branch
      %16 = sbr.rel (0) target = $region9
    $region8: #{tpu_custom_call.1} parent=1 // pred_region
      _
    $region9: #{tpu_custom_call.1} parent=1 // pred_fallthru
      _
    // Predicated region
    $region10: #{tpu_custom_call.1} parent=1 // pred_check
      _
    $region11: #{tpu_custom_call.1} parent=1 // pred_check_branch
      %18 = sbr.rel (0) target = $region13
    $region12: #{tpu_custom_call.1} parent=1 // pred_region
      _
    $region13: #{tpu_custom_call.1} parent=1 // pred_fallthru
      _
    // Predicated region
    $region14: #{tpu_custom_call.1} parent=1 // pred_check
      _
    $region15: #{tpu_custom_call.1} parent=1 // pred_check_branch
      %20 = sbr.rel (0) target = $region17
    $region16: #{tpu_custom_call.1} parent=1 // pred_region
      _
    $region17: #{tpu_custom_call.1} parent=1 // pred_fallthru
      _
    // Predicated region
    $region18: #{tpu_custom_call.1} parent=1 // pred_check
      _
    $region19: #{tpu_custom_call.1} parent=1 // pred_check_branch
      %22 = sbr.rel (0) target = $region21
    $region20: #{tpu_custom_call.1} parent=1 // pred_region
      _
    $region21: #{tpu_custom_call.1} parent=1 // pred_fallthru
      _
    // Predicated region
    $region22: #{tpu_custom_call.1} parent=1 // pred_check
      _
    $region23: #{tpu_custom_call.1} parent=1 // pred_check_branch
      %24 = sbr.rel (0) target = $region25
    $region24: #{tpu_custom_call.1} parent=1 // pred_region
      _
    $region25: #{tpu_custom_call.1} parent=1 // pred_fallthru
      _
    // Predicated region
    $region26: #{tpu_custom_call.1} parent=1 // pred_check
      _
    $region27: #{tpu_custom_call.1} parent=1 // pred_check_branch
      %26 = sbr.rel (0) target = $region29
    $region28: #{tpu_custom_call.1} parent=1 // pred_region
      _
    $region29: #{tpu_custom_call.1} parent=1 // pred_fallthru
      _
    %v28 = vld [vmem:[%s0] sm:$0xf]
    %v29 = vld [vmem:[%s0 + $0x4] sm:$0xf]
    %v30 = vld [vmem:[%s1] sm:$0xf]
    %v31 = vld [vmem:[%s1 + $0x4] sm:$0xf]
    %v32 = vld [vmem:[%s1 + $0x8] sm:$0xf]
    %v33 = vld [vmem:[%s1 + $0xc] sm:$0xf]
    %v34 = vld [vmem:[%s2] sm:$0xff]
    %v35 = vld [vmem:[%s2 + $0x8] sm:$0xff]
    %v36 = vld [vmem:[%s2 + $0x10] sm:$0xff]
    %v37 = vld [vmem:[%s2 + $0x18] sm:$0xff]
    %39 = vset.pattern.permute.xlu0 0
    %40 = vperm.xlu0 %39, %v34
    %v41 = vpop.permute.xlu0 %40
    %44 = vset.pattern.permute.xlu0 0
    %45 = vperm.xlu0 %44, %v35
    %v46 = vpop.permute.xlu0 %45
    %49 = vset.pattern.permute.xlu0 0
    %50 = vperm.xlu0 %49, %v36
    %v51 = vpop.permute.xlu0 %50
    %54 = vset.pattern.permute.xlu0 0
    %55 = vperm.xlu0 %54, %v37
    %v56 = vpop.permute.xlu0 %55
    %v62 = vunpack.c.l.b16 %v30
    %v63 = vunpack.c.l.b16 %v31
    %v64 = vunpack.c.l.b16 %v32
    %v65 = vunpack.c.l.b16 %v33
    %v66 = vpack.c.b16 %v63, %v62
    %v67 = vpack.c.b16 %v65, %v64
    %v70 = vunpack.c.l.b16 %v28
    %v71 = vunpack.c.l.b16 %v29
    %v72 = vpack.c.b16 %v71, %v70
    %vm74 = vcmask 130048
    %v76 = vsel %vm74, %v66, 0
    %v79 = vsel %vm74, %v67, 0
    %81 = vmatprep.subr.bf16.mxu0 0
    %82 = vmatpush1.bf16.msra.mxu0 %v72
    %83 = vmatprep.subr.bf16.mxu0 0
    %84 = vmatpush1.bf16.msra.mxu0 0
    %85 = vmatprep.subr.bf16.mxu0 0
    %86 = vmatpush1.bf16.msra.mxu0 0
    %87 = vmatprep.subr.bf16.mxu0 0
    %88 = vmatpush1.bf16.msra.mxu0 0
    %89 = vmatprep.subr.bf16.mxu0 0
    %90 = vmatpush1.bf16.msra.mxu0 0
    %91 = vmatprep.subr.bf16.mxu0 0
    %92 = vmatpush1.bf16.msra.mxu0 0
    %93 = vmatprep.subr.bf16.mxu0 0
    %94 = vmatpush1.bf16.msra.mxu0 0
    %95 = vmatprep.subr.bf16.mxu0 0
    %96 = vmatpush1.bf16.msra.mxu0 0
    %97 = vmatprep.subr.bf16.mxu0 0
    %98 = vmatpush1.bf16.msra.mxu0 0
    %99 = vmatprep.subr.bf16.mxu0 0
    %100 = vmatpush1.bf16.msra.mxu0 0
    %101 = vmatprep.subr.bf16.mxu0 0
    %102 = vmatpush1.bf16.msra.mxu0 0
    %103 = vmatprep.subr.bf16.mxu0 0
    %104 = vmatpush1.bf16.msra.mxu0 0
    %105 = vmatprep.subr.bf16.mxu0 0
    %106 = vmatpush1.bf16.msra.mxu0 0
    %107 = vmatprep.subr.bf16.mxu0 0
    %108 = vmatpush1.bf16.msra.mxu0 0
    %109 = vmatprep.subr.bf16.mxu0 0
    %110 = vmatpush1.bf16.msra.mxu0 0
    %111 = vmatprep.subr.bf16.mxu0 0
    %112 = vmatpush1.bf16.msra.mxu0 0
    %113 = vmatprep.mubr.bf16.mxu0 0
    %114 = vmatmul.mubr.bf16.gmra.mrb[0].mxu0 %v76
    %v115 = vpop.f32.mrb[0].mxu0
    %v116 = vadd.f32 %v41, %v115
    %v117 = vpop.f32.mrb[0].mxu0
    %v118 = vpop.f32.mrb[0].mxu0
    %v119 = vadd.f32 %v46, %v118
    %v120 = vpop.f32.mrb[0].mxu0
    %121 = vmatprep.mubr.bf16.mxu0 0
    %122 = vmatmul.mubr.bf16.gmra.mrb[0].mxu0 %v79
    %v123 = vpop.f32.mrb[0].mxu0
    %v124 = vadd.f32 %v51, %v123
    %v125 = vpop.f32.mrb[0].mxu0
    %v126 = vpop.f32.mrb[0].mxu0
    %v127 = vadd.f32 %v56, %v126
    %v128 = vpop.f32.mrb[0].mxu0
    %129 = vdwg.mxu0
    %vm130 = vcmp.gt.f32.partialorder %v116, 0.0
    %vm131 = vcmp.gt.f32.partialorder %v119, 0.0
    %vm132 = vcmp.gt.f32.partialorder %v124, 0.0
    %vm133 = vcmp.gt.f32.partialorder %v127, 0.0
    %v134 = vmin.f32 %v116, 0.0
    %v135 = vmin.f32 %v119, 0.0
    %v136 = vmin.f32 %v124, 0.0
    %v137 = vmin.f32 %v127, 0.0
    %v138 = vmul.f32 %v134, 1.442695
    %v139 = vpow.pop %v138
    %v140 = vmul.f32 %v135, 1.442695
    %v141 = vpow.pop %v140
    %v142 = vmul.f32 %v136, 1.442695
    %v143 = vpow.pop %v142
    %v144 = vmul.f32 %v137, 1.442695
    %v145 = vpow.pop %v144
    %v146 = vsub.f32 %v139, 1.0
    %v147 = vsub.f32 %v141, 1.0
    %v148 = vsub.f32 %v143, 1.0
    %v149 = vsub.f32 %v145, 1.0
    %v150 = vsel %vm130, %v116, %v146
    %v151 = vsel %vm131, %v119, %v147
    %v152 = vsel %vm132, %v124, %v148
    %v153 = vsel %vm133, %v127, %v149
    %v154 = vld [vmem:[%s3] sm:$0xf]
    %v155 = vld [vmem:[%s3 + $0x4] sm:$0xf]
    %v156 = vld [vmem:[%s3 + $0x8] sm:$0xf]
    %v157 = vld [vmem:[%s3 + $0xc] sm:$0xf]
    %v158 = vpack.c.bf16 %v151, %v150
    %v159 = vpack.c.bf16 %v153, %v152
    %v160 = vld [vmem:[%s4] sm:$0xff]
    %v161 = vld [vmem:[%s4 + $0x8] sm:$0xff]
    %v162 = vld [vmem:[%s4 + $0x10] sm:$0xff]
    %v163 = vld [vmem:[%s4 + $0x18] sm:$0xff]
    %165 = vset.pattern.permute.xlu0 0
    %166 = vperm.xlu0 %165, %v160
    %v167 = vpop.permute.xlu0 %166
    %170 = vset.pattern.permute.xlu0 0
    %171 = vperm.xlu0 %170, %v161
    %v172 = vpop.permute.xlu0 %171
    %175 = vset.pattern.permute.xlu0 0
    %176 = vperm.xlu0 %175, %v162
    %v177 = vpop.permute.xlu0 %176
    %180 = vset.pattern.permute.xlu0 0
    %181 = vperm.xlu0 %180, %v163
    %v182 = vpop.permute.xlu0 %181
    %v188 = vunpack.c.l.b16 %v154
    %v189 = vunpack.c.l.b16 %v155
    %v190 = vunpack.c.l.b16 %v156
    %v191 = vunpack.c.l.b16 %v157
    %v192 = vpack.c.b16 %v189, %v188
    %v193 = vpack.c.b16 %v191, %v190
    %vm194 = vcmask 261120
    %v196 = vsel %vm194, %v192, 0
    %v199 = vsel %vm194, %v193, 0
    %201 = vmatprep.subr.bf16.mxu0 0
    %202 = vmatpush1.bf16.msra.mxu0 %v158
    %203 = vmatprep.subr.bf16.mxu0 0
    %204 = vmatpush1.bf16.msra.mxu0 %v159
    %205 = vmatprep.subr.bf16.mxu0 0
    %206 = vmatpush1.bf16.msra.mxu0 0
    %207 = vmatprep.subr.bf16.mxu0 0
    %208 = vmatpush1.bf16.msra.mxu0 0
    %209 = vmatprep.subr.bf16.mxu0 0
    %210 = vmatpush1.bf16.msra.mxu0 0
    %211 = vmatprep.subr.bf16.mxu0 0
    %212 = vmatpush1.bf16.msra.mxu0 0
    %213 = vmatprep.subr.bf16.mxu0 0
    %214 = vmatpush1.bf16.msra.mxu0 0
    %215 = vmatprep.subr.bf16.mxu0 0
    %216 = vmatpush1.bf16.msra.mxu0 0
    %217 = vmatprep.subr.bf16.mxu0 0
    %218 = vmatpush1.bf16.msra.mxu0 0
    %219 = vmatprep.subr.bf16.mxu0 0
    %220 = vmatpush1.bf16.msra.mxu0 0
    %221 = vmatprep.subr.bf16.mxu0 0
    %222 = vmatpush1.bf16.msra.mxu0 0
    %223 = vmatprep.subr.bf16.mxu0 0
    %224 = vmatpush1.bf16.msra.mxu0 0
    %225 = vmatprep.subr.bf16.mxu0 0
    %226 = vmatpush1.bf16.msra.mxu0 0
    %227 = vmatprep.subr.bf16.mxu0 0
    %228 = vmatpush1.bf16.msra.mxu0 0
    %229 = vmatprep.subr.bf16.mxu0 0
    %230 = vmatpush1.bf16.msra.mxu0 0
    %231 = vmatprep.subr.bf16.mxu0 0
    %232 = vmatpush1.bf16.msra.mxu0 0
    %233 = vmatprep.mubr.bf16.mxu0 0
    %234 = vmatmul.mubr.bf16.gmra.mrb[0].mxu0 %v196
    %v235 = vpop.f32.mrb[0].mxu0
    %v236 = vadd.f32 %v167, %v235
    %v237 = vpop.f32.mrb[0].mxu0
    %v238 = vpop.f32.mrb[0].mxu0
    %v239 = vadd.f32 %v172, %v238
    %v240 = vpop.f32.mrb[0].mxu0
    %241 = vmatprep.mubr.bf16.mxu0 0
    %242 = vmatmul.mubr.bf16.gmra.mrb[0].mxu0 %v199
    %v243 = vpop.f32.mrb[0].mxu0
    %v244 = vadd.f32 %v177, %v243
    %v245 = vpop.f32.mrb[0].mxu0
    %v246 = vpop.f32.mrb[0].mxu0
    %v247 = vadd.f32 %v182, %v246
    %v248 = vpop.f32.mrb[0].mxu0
    %249 = vdwg.mxu0
    %vm250 = vcmp.gt.f32.partialorder %v236, 0.0
    %vm251 = vcmp.gt.f32.partialorder %v239, 0.0
    %vm252 = vcmp.gt.f32.partialorder %v244, 0.0
    %vm253 = vcmp.gt.f32.partialorder %v247, 0.0
    %v254 = vmin.f32 %v236, 0.0
    %v255 = vmin.f32 %v239, 0.0
    %v256 = vmin.f32 %v244, 0.0
    %v257 = vmin.f32 %v247, 0.0
    %v258 = vmul.f32 %v254, 1.442695
    %v259 = vpow.pop %v258
    %v260 = vmul.f32 %v255, 1.442695
    %v261 = vpow.pop %v260
    %v262 = vmul.f32 %v256, 1.442695
    %v263 = vpow.pop %v262
    %v264 = vmul.f32 %v257, 1.442695
    %v265 = vpow.pop %v264
    %v266 = vsub.f32 %v259, 1.0
    %v267 = vsub.f32 %v261, 1.0
    %v268 = vsub.f32 %v263, 1.0
    %v269 = vsub.f32 %v265, 1.0
    %v270 = vsel %vm250, %v236, %v266
    %v271 = vsel %vm251, %v239, %v267
    %v272 = vsel %vm252, %v244, %v268
    %v273 = vsel %vm253, %v247, %v269
    %v274 = vld [vmem:[%s5] sm:$0xf]
    %v275 = vpack.c.bf16 %v271, %v270
    %v276 = vpack.c.bf16 %v273, %v272
    %v277 = vld [vmem:[%s6] sm:$0xff]
    %279 = vset.pattern.permute.xlu0 0
    %280 = vperm.xlu0 %279, %v277
    %v281 = vpop.permute.xlu0 %280
    %v284 = vsel %vm194, %v274, 0
    %286 = vmatprep.subr.bf16.mxu0 0
    %287 = vmatpush1.bf16.msra.mxu0 %v275
    %288 = vmatprep.subr.bf16.mxu0 0
    %289 = vmatpush1.bf16.msra.mxu0 %v276
    %290 = vmatprep.subr.bf16.mxu0 0
    %291 = vmatpush1.bf16.msra.mxu0 0
    %292 = vmatprep.subr.bf16.mxu0 0
    %293 = vmatpush1.bf16.msra.mxu0 0
    %294 = vmatprep.subr.bf16.mxu0 0
    %295 = vmatpush1.bf16.msra.mxu0 0
    %296 = vmatprep.subr.bf16.mxu0 0
    %297 = vmatpush1.bf16.msra.mxu0 0
    %298 = vmatprep.subr.bf16.mxu0 0
    %299 = vmatpush1.bf16.msra.mxu0 0
    %300 = vmatprep.subr.bf16.mxu0 0
    %301 = vmatpush1.bf16.msra.mxu0 0
    %302 = vmatprep.subr.bf16.mxu0 0
    %303 = vmatpush1.bf16.msra.mxu0 0
    %304 = vmatprep.subr.bf16.mxu0 0
    %305 = vmatpush1.bf16.msra.mxu0 0
    %306 = vmatprep.subr.bf16.mxu0 0
    %307 = vmatpush1.bf16.msra.mxu0 0
    %308 = vmatprep.subr.bf16.mxu0 0
    %309 = vmatpush1.bf16.msra.mxu0 0
    %310 = vmatprep.subr.bf16.mxu0 0
    %311 = vmatpush1.bf16.msra.mxu0 0
    %312 = vmatprep.subr.bf16.mxu0 0
    %313 = vmatpush1.bf16.msra.mxu0 0
    %314 = vmatprep.subr.bf16.mxu0 0
    %315 = vmatpush1.bf16.msra.mxu0 0
    %316 = vmatprep.subr.bf16.mxu0 0
    %317 = vmatpush1.bf16.msra.mxu0 0
    %318 = vmatprep.mubr.bf16.mxu0 0
    %319 = vmatmul.mubr.bf16.gmra.mrb[0].mxu0 %v284
    %v320 = vpop.f32.mrb[0].mxu0
    %v321 = vadd.f32 %v281, %v320
    %v322 = vpop.f32.mrb[0].mxu0
    %v323 = vpop.f32.mrb[0].mxu0
    %v324 = vpop.f32.mrb[0].mxu0
    %325 = vdwg.mxu0
    %v326 = vmul.f32 %v321, 0.5
    %v327 = vtanh.pop %v326
    %v328 = vadd.f32 %v327, 1.0
    %v329 = vmul.f32 %v328, 0.5
    %330 = vst [vmem:[#allocation2] sm:$0xff] %v329
    // Predicated region
    $region30: #{tpu_custom_call.1} parent=1 // pred_check
      _
    $region31: #{tpu_custom_call.1} parent=1 // pred_check_branch
      %332 = sbr.rel (0) target = $region33
    $region32: #{tpu_custom_call.1} parent=1 // pred_region
      %s334 = ssub.s32 128, 128
      %335 = vsyncadd [#allocation3], %s334
      %s337 = sshll.u32 [#allocation2], 4
      %s338 = int_to_ptr.vmem [resolvable:$true] %s337
      %340 = dma.vmem_to_hbm [thread:$0]  %s338, 128, %s7, [#allocation3]
    $region33: #{tpu_custom_call.1} parent=1 // pred_fallthru
      _
    // Predicated region
    $region34: #{tpu_custom_call.1} parent=1 // pred_check
      _
    $region35: #{tpu_custom_call.1} parent=1 // pred_check_branch
      %342 = sbr.rel (0) target = $region37
    $region36: #{tpu_custom_call.1} parent=1 // pred_region
      %343 = dma.done [#allocation3], 128
    $region37: #{tpu_custom_call.1} parent=1 // pred_fallthru
      _
    %344 = vsyncpa [#allocation3], 1

</llo_original>
